<compile_context>
chip_gen: v5e
topology: v5e:2x2
jax: 0.10.0
libtpu: 0.0.40
codegen_flags: <defaults>
</compile_context>

<pallas_src>
import functools

import jax
import jax.numpy as jnp
from jax import lax
from jax.experimental import pallas as pl
from jax.experimental.pallas import tpu as pltpu


# ----------------------------- Pallas kernel -------------------------------
def cida_kernel(
    xu_ref,                                   # (TB, Dx+Du)  fused input
    w1_ref, b1_ref,                           # blockdiag(x_net L1, u_net L1)
    w2_ref, b2_ref,                           # blockdiag(x_net L2, u_net L2)
    wm_ref, bm_ref,                           # merge_net
    wh_ref, bh_ref,                           # fused class+domain head (lane padded)
    y_ref,                                    # (TB, C)   log-softmax output
    d_ref,                                    # (TB, 1)   domain output
    *, n_classes: int,
):
    f32 = jnp.float32
    xu = xu_ref[...]                          # already f32 (wrapper mirrors .float())

    # x_net || u_net as two block-diagonal matmuls (h2 == cat([xf, uf], 1))
    h1 = jnp.maximum(jnp.dot(xu, w1_ref[...], preferred_element_type=f32) + b1_ref[...], 0.0)
    h2 = jnp.maximum(jnp.dot(h1, w2_ref[...], preferred_element_type=f32) + b2_ref[...], 0.0)

    # merge_net
    feat = jnp.maximum(jnp.dot(h2, wm_ref[...], preferred_element_type=f32) + bm_ref[...], 0.0)

    # fused class_net + domain_net head (128-lane wide internally)
    head = jnp.dot(feat, wh_ref[...], preferred_element_type=f32) + bh_ref[...]

    lane = lax.broadcasted_iota(jnp.int32, head.shape, 1)
    is_logit = lane < n_classes
    masked = jnp.where(is_logit, head, -jnp.inf)
    m = jnp.max(masked, axis=-1, keepdims=True)
    p = jnp.exp(masked - m)                   # exp(-inf) = 0 on non-logit lanes
    lse = m + jnp.log(jnp.sum(p, axis=-1, keepdims=True))

    y_ref[...] = head[:, :n_classes] - lse                    # log_softmax(logits)
    d_ref[...] = head[:, n_classes:n_classes + 1]             # raw domain output


# ------------------------------ helpers --------------------------------------
def _round_up(n, m):
    return ((n + m - 1) // m) * m


def _block_diag(a, b):
    ra, ca = a.shape
    rb, cb = b.shape
    top = jnp.concatenate([a, jnp.zeros((ra, cb), a.dtype)], axis=1)
    bot = jnp.concatenate([jnp.zeros((rb, ca), b.dtype), b], axis=1)
    return jnp.concatenate([top, bot], axis=0)


def _pick_tiling(B, tb_max=2048):
    """Batch tiling: big tiles, minimal padding waste, >=2 steps for v7x dual-TC."""
    B8 = _round_up(max(B, 1), 8)
    n_steps = max(1, pl.cdiv(B8, tb_max))
    if n_steps == 1 and B8 >= 512:
        n_steps = 2                            # keep both v7x TensorCores busy
    TB = _round_up(pl.cdiv(B8, n_steps), 8)
    Bp = TB * n_steps
    return TB, Bp, n_steps


# --------------------------- one-time param packing --------------------------
def pack_params(p):
    """Trace-time packing: block-diagonal x/u sub-nets + lane-dense fused head."""
    C = p["wc"].shape[1]
    head_w = _round_up(C + 1, 128)             # computed from C (no C+1>128 trap)

    w1 = _block_diag(p["wx1"], p["wu1"])
    b1 = jnp.concatenate([p["bx1"], p["bu1"]], axis=1)
    w2 = _block_diag(p["wx2"], p["wu2"])
    b2 = jnp.concatenate([p["bx2"], p["bu2"]], axis=1)

    wh = jnp.concatenate([p["wc"], p["wd"]], axis=1)           # (F, C+1)
    wh = jnp.pad(wh, ((0, 0), (0, head_w - (C + 1))))
    bh = jnp.concatenate([p["bc"], p["bd"]], axis=1)
    bh = jnp.pad(bh, ((0, 0), (0, head_w - (C + 1))))

    packed = {"w1": w1, "b1": b1, "w2": w2, "b2": b2,
              "wm": p["wm"], "bm": p["bm"], "wh": wh, "bh": bh}
    return packed, C


# ------------------------------ forward wrapper -------------------------------
@functools.partial(jax.jit, static_argnames=("n_classes",))
def cida_forward(x, u, packed, n_classes):
    x = x.astype(jnp.float32)                  # mirrors x.float()
    u = u.astype(jnp.float32)                  # mirrors u.float()

    B, Dx = x.shape
    Du = u.shape[1]
    C = n_classes

    # u rides as extra column(s) of x -> no (TB, 1) lane-padded input tile
    xu = jnp.concatenate([x, u], axis=1)       # (B, Dx+Du)

    TB, Bp, n_steps = _pick_tiling(B)
    if Bp != B:
        xu = jnp.pad(xu, ((0, Bp - B), (0, 0)))

    weights = (packed["w1"], packed["b1"], packed["w2"], packed["b2"],
               packed["wm"], packed["bm"], packed["wh"], packed["bh"])
    # Resident weight/bias specs: full shape, constant index_map (no re-DMA per step)
    w_specs = [pl.BlockSpec(w.shape, lambda i: (0, 0)) for w in weights]

    D1 = packed["w1"].shape[0]                 # Dx + Du
    N1 = packed["w1"].shape[1]                 # H1 + H2
    N2 = packed["w2"].shape[1]                 # Fx + Fu
    F = packed["wm"].shape[1]
    HW = packed["wh"].shape[1]
    flops = 2 * Bp * (D1 * N1 + N1 * N2 + N2 * F + F * HW)
    bytes_accessed = 4 * (Bp * D1 + sum(w.size for w in weights) + Bp * (C + 1))
    cost = pl.CostEstimate(flops=flops,
                           transcendentals=Bp * (HW + 1),      # exp over all lanes + log
                           bytes_accessed=bytes_accessed)

    y, d = pl.pallas_call(
        functools.partial(cida_kernel, n_classes=C),
        out_shape=(jax.ShapeDtypeStruct((Bp, C), jnp.float32),
                   jax.ShapeDtypeStruct((Bp, 1), jnp.float32)),
        grid=(n_steps,),
        in_specs=[pl.BlockSpec((TB, D1), lambda i: (i, 0)), *w_specs],
        out_specs=(pl.BlockSpec((TB, C), lambda i: (i, 0)),
                   pl.BlockSpec((TB, 1), lambda i: (i, 0))),
        compiler_params=pltpu.CompilerParams(
            dimension_semantics=("parallel",),
            vmem_limit_bytes=32 << 20),        # TB=2048 safe even on v5e's 16 MiB default
        cost_estimate=cost,
    )(xu, *weights)

    return y[:B], d[:B]


# --------------------------- parameter init ---------------------------------
def init_params(key, Dx, Du, H1, Fx, H2, Fu, F, C):
    """nn.init.normal_(w, std=0.01); nn.init.constant_(b, 0) for every Linear."""
    ks = jax.random.split(key, 7)
    n = lambda k, shape: (0.01 * jax.random.normal(k, shape)).astype(jnp.float32)
    z = lambda shape: jnp.zeros(shape, jnp.float32)
    return {
        # x_net
        "wx1": n(ks[0], (Dx, H1)), "bx1": z((1, H1)),
        "wx2": n(ks[1], (H1, Fx)), "bx2": z((1, Fx)),
        # u_net
        "wu1": n(ks[2], (Du, H2)), "bu1": z((1, H2)),
        "wu2": n(ks[3], (H2, Fu)), "bu2": z((1, Fu)),
        # merge_net (full weight over the concatenated feature)
        "wm": n(ks[4], (Fx + Fu, F)), "bm": z((1, F)),
        # class_net
        "wc": n(ks[5], (F, C)), "bc": z((1, C)),
        # domain_net
        "wd": n(ks[6], (F, 1)), "bd": z((1, 1)),
    }


# --------------------------- pure-JAX reference ------------------------------
def cida_reference(x, u, p):
    x = x.astype(jnp.float32)
    u = u.astype(jnp.float32)
    relu = lambda v: jnp.maximum(v, 0.0)
    xf = relu(relu(x @ p["wx1"] + p["bx1"]) @ p["wx2"] + p["bx2"])
    uf = relu(relu(u @ p["wu1"] + p["bu1"]) @ p["wu2"] + p["bu2"])
    feat = relu(jnp.concatenate([xf, uf], axis=1) @ p["wm"] + p["bm"])
    logits = feat @ p["wc"] + p["bc"]
    y_hat = jax.nn.log_softmax(logits, axis=1)
    u_hat = feat @ p["wd"] + p["bd"]
    return y_hat, u_hat


# ------------------------------- main ----------------------------------------
if __name__ == "__main__":
    # Small shapes consistent with the forward pass.
    B, Dx, Du = 8, 32, 1
    H1, Fx = 64, 16
    H2, Fu = 16, 8
    F, C = 32, 10

    key = jax.random.PRNGKey(0)
    k_x, k_u, k_p = jax.random.split(key, 3)
    x = jax.random.normal(k_x, (B, Dx), dtype=jnp.float32)
    u = jax.random.uniform(k_u, (B, Du), dtype=jnp.float32)   # continuous domain factor
    params = init_params(k_p, Dx, Du, H1, Fx, H2, Fu, F, C)

    # One-time packing (outside the per-call forward path).
    packed, n_classes = pack_params(params)
    packed = jax.tree_util.tree_map(jax.block_until_ready, packed)

    y_hat, u_hat = cida_forward(x, u, packed, n_classes)
    jax.block_until_ready((y_hat, u_hat))

    # correctness check vs pure-JAX reference
    y_ref, u_ref = cida_reference(x, u, params)
    assert y_hat.shape == (B, C) and u_hat.shape == (B, 1)
    assert jnp.allclose(y_hat, y_ref, atol=1e-5, rtol=1e-5)
    assert jnp.allclose(u_hat, u_ref, atol=1e-5, rtol=1e-5)
    # log_softmax rows must exponentiate-sum to 1
    assert jnp.allclose(jnp.sum(jnp.exp(y_hat), axis=1), 1.0, atol=1e-5)

    print("KERNEL_OK")
</pallas_src>

<mosaic_0001>
module attributes {stable_mosaic.version = 11 : i64} {
  func.func @cida_kernel(%arg0: i32, %arg1: memref<8x33xf32, #tpu.memory_space<vmem>>, %arg2: memref<33x80xf32, #tpu.memory_space<vmem>>, %arg3: memref<1x80xf32, #tpu.memory_space<vmem>>, %arg4: memref<80x24xf32, #tpu.memory_space<vmem>>, %arg5: memref<1x24xf32, #tpu.memory_space<vmem>>, %arg6: memref<24x32xf32, #tpu.memory_space<vmem>>, %arg7: memref<1x32xf32, #tpu.memory_space<vmem>>, %arg8: memref<32x128xf32, #tpu.memory_space<vmem>>, %arg9: memref<1x128xf32, #tpu.memory_space<vmem>>, %arg10: memref<8x10xf32, #tpu.memory_space<vmem>>, %arg11: memref<8x1xf32, #tpu.memory_space<vmem>>) attributes {dimension_semantics = [#tpu.dimension_semantics<parallel>], iteration_bounds = array<i64: 1>, scalar_prefetch = 0 : i64, scratch_operands = 0 : i64, tpu.core_type = #tpu.core_type<tc>, window_params = [{transform_indices = @transform_0, window_bounds = array<i64: 8, 33>}, {pipeline_mode = #tpu.pipeline_mode<synchronous>, transform_indices = @transform_1, window_bounds = array<i64: 33, 80>}, {pipeline_mode = #tpu.pipeline_mode<synchronous>, transform_indices = @transform_2, window_bounds = array<i64: 1, 80>}, {pipeline_mode = #tpu.pipeline_mode<synchronous>, transform_indices = @transform_3, window_bounds = array<i64: 80, 24>}, {pipeline_mode = #tpu.pipeline_mode<synchronous>, transform_indices = @transform_4, window_bounds = array<i64: 1, 24>}, {pipeline_mode = #tpu.pipeline_mode<synchronous>, transform_indices = @transform_5, window_bounds = array<i64: 24, 32>}, {pipeline_mode = #tpu.pipeline_mode<synchronous>, transform_indices = @transform_6, window_bounds = array<i64: 1, 32>}, {pipeline_mode = #tpu.pipeline_mode<synchronous>, transform_indices = @transform_7, window_bounds = array<i64: 32, 128>}, {pipeline_mode = #tpu.pipeline_mode<synchronous>, transform_indices = @transform_8, window_bounds = array<i64: 1, 128>}, {transform_indices = @transform_9, window_bounds = array<i64: 8, 10>}, {transform_indices = @transform_10, window_bounds = array<i64: 8, 1>}]} {
    %c0 = arith.constant 0 : index
    %c0_0 = arith.constant 0 : index
    %0 = vector.load %arg1[%c0, %c0_0] : memref<8x33xf32, #tpu.memory_space<vmem>>, vector<8x33xf32>
    %c0_1 = arith.constant 0 : index
    %c0_2 = arith.constant 0 : index
    %1 = vector.load %arg2[%c0_1, %c0_2] : memref<33x80xf32, #tpu.memory_space<vmem>>, vector<33x80xf32>
    %cst = arith.constant dense<0.000000e+00> : vector<8x80xf32>
    %2 = tpu.matmul %0, %1, %cst {dimension_numbers = #tpu.dot_dimension_numbers<[1], [0], [0], [1], [0, 0, 1, 1], [], []>} : vector<8x33xf32>, vector<33x80xf32>, vector<8x80xf32> -> vector<8x80xf32>
    %c0_3 = arith.constant 0 : index
    %c0_4 = arith.constant 0 : index
    %3 = vector.load %arg3[%c0_3, %c0_4] : memref<1x80xf32, #tpu.memory_space<vmem>>, vector<1x80xf32>
    %4 = vector.broadcast %3 : vector<1x80xf32> to vector<8x80xf32>
    %5 = arith.addf %2, %4 : vector<8x80xf32>
    %cst_5 = arith.constant 0.000000e+00 : f32
    %6 = vector.broadcast %cst_5 : f32 to vector<8x80xf32>
    %7 = arith.maximumf %5, %6 : vector<8x80xf32>
    %c0_6 = arith.constant 0 : index
    %c0_7 = arith.constant 0 : index
    %8 = vector.load %arg4[%c0_6, %c0_7] : memref<80x24xf32, #tpu.memory_space<vmem>>, vector<80x24xf32>
    %cst_8 = arith.constant dense<0.000000e+00> : vector<8x24xf32>
    %9 = tpu.matmul %7, %8, %cst_8 {dimension_numbers = #tpu.dot_dimension_numbers<[1], [0], [0], [1], [0, 0, 1, 1], [], []>} : vector<8x80xf32>, vector<80x24xf32>, vector<8x24xf32> -> vector<8x24xf32>
    %c0_9 = arith.constant 0 : index
    %c0_10 = arith.constant 0 : index
    %10 = vector.load %arg5[%c0_9, %c0_10] : memref<1x24xf32, #tpu.memory_space<vmem>>, vector<1x24xf32>
    %11 = vector.broadcast %10 : vector<1x24xf32> to vector<8x24xf32>
    %12 = arith.addf %9, %11 : vector<8x24xf32>
    %cst_11 = arith.constant 0.000000e+00 : f32
    %13 = vector.broadcast %cst_11 : f32 to vector<8x24xf32>
    %14 = arith.maximumf %12, %13 : vector<8x24xf32>
    %c0_12 = arith.constant 0 : index
    %c0_13 = arith.constant 0 : index
    %15 = vector.load %arg6[%c0_12, %c0_13] : memref<24x32xf32, #tpu.memory_space<vmem>>, vector<24x32xf32>
    %cst_14 = arith.constant dense<0.000000e+00> : vector<8x32xf32>
    %16 = tpu.matmul %14, %15, %cst_14 {dimension_numbers = #tpu.dot_dimension_numbers<[1], [0], [0], [1], [0, 0, 1, 1], [], []>} : vector<8x24xf32>, vector<24x32xf32>, vector<8x32xf32> -> vector<8x32xf32>
    %c0_15 = arith.constant 0 : index
    %c0_16 = arith.constant 0 : index
    %17 = vector.load %arg7[%c0_15, %c0_16] : memref<1x32xf32, #tpu.memory_space<vmem>>, vector<1x32xf32>
    %18 = vector.broadcast %17 : vector<1x32xf32> to vector<8x32xf32>
    %19 = arith.addf %16, %18 : vector<8x32xf32>
    %cst_17 = arith.constant 0.000000e+00 : f32
    %20 = vector.broadcast %cst_17 : f32 to vector<8x32xf32>
    %21 = arith.maximumf %19, %20 : vector<8x32xf32>
    %c0_18 = arith.constant 0 : index
    %c0_19 = arith.constant 0 : index
    %22 = vector.load %arg8[%c0_18, %c0_19] : memref<32x128xf32, #tpu.memory_space<vmem>>, vector<32x128xf32>
    %cst_20 = arith.constant dense<0.000000e+00> : vector<8x128xf32>
    %23 = tpu.matmul %21, %22, %cst_20 {dimension_numbers = #tpu.dot_dimension_numbers<[1], [0], [0], [1], [0, 0, 1, 1], [], []>} : vector<8x32xf32>, vector<32x128xf32>, vector<8x128xf32> -> vector<8x128xf32>
    %c0_21 = arith.constant 0 : index
    %c0_22 = arith.constant 0 : index
    %24 = vector.load %arg9[%c0_21, %c0_22] : memref<1x128xf32, #tpu.memory_space<vmem>>, vector<1x128xf32>
    %25 = vector.broadcast %24 : vector<1x128xf32> to vector<8x128xf32>
    %26 = arith.addf %23, %25 : vector<8x128xf32>
    %27 = tpu.iota {dimensions = array<i32: 1>} : vector<8x128xi32>
    %c10_i32 = arith.constant 10 : i32
    %28 = vector.broadcast %c10_i32 : i32 to vector<8x128xi32>
    %29 = arith.cmpi slt, %27, %28 : vector<8x128xi32>
    %cst_23 = arith.constant 0xFF800000 : f32
    %30 = vector.broadcast %cst_23 : f32 to vector<8x128xf32>
    %31 = arith.select %29, %26, %30 : vector<8x128xi1>, vector<8x128xf32>
    %cst_24 = arith.constant dense<0xFF800000> : vector<8xf32>
    %32 = vector.multi_reduction <maximumf>, %31, %cst_24 [1] : vector<8x128xf32> to vector<8xf32>
    %33 = vector.shape_cast %32 : vector<8xf32> to vector<8x1xf32>
    %34 = vector.broadcast %33 : vector<8x1xf32> to vector<8x128xf32>
    %35 = arith.subf %31, %34 : vector<8x128xf32>
    %36 = math.exp %35 : vector<8x128xf32>
    %cst_25 = arith.constant dense<0.000000e+00> : vector<8xf32>
    %37 = vector.multi_reduction <add>, %36, %cst_25 [1] : vector<8x128xf32> to vector<8xf32>
    %38 = vector.shape_cast %37 : vector<8xf32> to vector<8x1xf32>
    %39 = math.log %38 : vector<8x1xf32>
    %40 = arith.addf %33, %39 : vector<8x1xf32>
    %41 = vector.extract_strided_slice %26 {offsets = [0, 0], sizes = [8, 10], strides = [1, 1]} : vector<8x128xf32> to vector<8x10xf32>
    %42 = vector.broadcast %40 : vector<8x1xf32> to vector<8x10xf32>
    %43 = arith.subf %41, %42 : vector<8x10xf32>
    %c0_26 = arith.constant 0 : index
    %c0_27 = arith.constant 0 : index
    %44 = vector.load %arg10[%c0_26, %c0_27] : memref<8x10xf32, #tpu.memory_space<vmem>>, vector<8x10xf32>
    tpu.vector_store %arg10[%c0_26, %c0_27], %43 {strides = array<i32>} : memref<8x10xf32, #tpu.memory_space<vmem>>, vector<8x10xf32>,
    %45 = vector.extract_strided_slice %26 {offsets = [0, 10], sizes = [8, 1], strides = [1, 1]} : vector<8x128xf32> to vector<8x1xf32>
    %c0_28 = arith.constant 0 : index
    %c0_29 = arith.constant 0 : index
    %46 = vector.load %arg11[%c0_28, %c0_29] : memref<8x1xf32, #tpu.memory_space<vmem>>, vector<8x1xf32>
    tpu.vector_store %arg11[%c0_28, %c0_29], %45 {strides = array<i32>} : memref<8x1xf32, #tpu.memory_space<vmem>>, vector<8x1xf32>,
    return
  }
  func.func @transform_0(%arg0: i32) -> (i32, i32) {
    %c0_i32 = arith.constant 0 : i32
    %c0_i32_0 = arith.constant 0 : i32
    return %arg0, %c0_i32 : i32, i32
  }
  func.func @transform_1(%arg0: i32) -> (i32, i32) {
    %c0_i32 = arith.constant 0 : i32
    %c0_i32_0 = arith.constant 0 : i32
    %c0_i32_1 = arith.constant 0 : i32
    return %c0_i32, %c0_i32_0 : i32, i32
  }
  func.func @transform_2(%arg0: i32) -> (i32, i32) {
    %c0_i32 = arith.constant 0 : i32
    %c0_i32_0 = arith.constant 0 : i32
    %c0_i32_1 = arith.constant 0 : i32
    return %c0_i32, %c0_i32_0 : i32, i32
  }
  func.func @transform_3(%arg0: i32) -> (i32, i32) {
    %c0_i32 = arith.constant 0 : i32
    %c0_i32_0 = arith.constant 0 : i32
    %c0_i32_1 = arith.constant 0 : i32
    return %c0_i32, %c0_i32_0 : i32, i32
  }
  func.func @transform_4(%arg0: i32) -> (i32, i32) {
    %c0_i32 = arith.constant 0 : i32
    %c0_i32_0 = arith.constant 0 : i32
    %c0_i32_1 = arith.constant 0 : i32
    return %c0_i32, %c0_i32_0 : i32, i32
  }
  func.func @transform_5(%arg0: i32) -> (i32, i32) {
    %c0_i32 = arith.constant 0 : i32
    %c0_i32_0 = arith.constant 0 : i32
    %c0_i32_1 = arith.constant 0 : i32
    return %c0_i32, %c0_i32_0 : i32, i32
  }
  func.func @transform_6(%arg0: i32) -> (i32, i32) {
    %c0_i32 = arith.constant 0 : i32
    %c0_i32_0 = arith.constant 0 : i32
    %c0_i32_1 = arith.constant 0 : i32
    return %c0_i32, %c0_i32_0 : i32, i32
  }
  func.func @transform_7(%arg0: i32) -> (i32, i32) {
    %c0_i32 = arith.constant 0 : i32
    %c0_i32_0 = arith.constant 0 : i32
    %c0_i32_1 = arith.constant 0 : i32
    return %c0_i32, %c0_i32_0 : i32, i32
  }
  func.func @transform_8(%arg0: i32) -> (i32, i32) {
    %c0_i32 = arith.constant 0 : i32
    %c0_i32_0 = arith.constant 0 : i32
    %c0_i32_1 = arith.constant 0 : i32
    return %c0_i32, %c0_i32_0 : i32, i32
  }
  func.func @transform_9(%arg0: i32) -> (i32, i32) {
    %c0_i32 = arith.constant 0 : i32
    %c0_i32_0 = arith.constant 0 : i32
    return %arg0, %c0_i32 : i32, i32
  }
  func.func @transform_10(%arg0: i32) -> (i32, i32) {
    %c0_i32 = arith.constant 0 : i32
    %c0_i32_0 = arith.constant 0 : i32
    return %arg0, %c0_i32 : i32, i32
  }
}

</mosaic_0001>

<llo_original>
// kernel: cida_forward.1
$region0: #{cida_forward.1}
  #allocation0 [shape = 'u32[]', space=smem, size = 0x4, offset = 0x4, fixed_abs, tag = 'smem constant byte address 0x4 - core index']
  #allocation1 [shape = 'u32[72,128]{1,0:T(1,128)}', space=vmem, size = 0x9000, scoped, tag = 'internal scratch']
  %s0 = inlined_call_operand.vmem [shape: f32[8,33], index: 0, kind: input, shape index: {}]
  %s1 = inlined_call_operand.vmem [shape: f32[33,80], index: 1, kind: input, shape index: {}]
  %s2 = inlined_call_operand.vmem [shape: f32[1,80], index: 2, kind: input, shape index: {}]
  %s3 = inlined_call_operand.vmem [shape: f32[80,24], index: 3, kind: input, shape index: {}]
  %s4 = inlined_call_operand.vmem [shape: f32[1,24], index: 4, kind: input, shape index: {}]
  %s5 = inlined_call_operand.vmem [shape: f32[24,32], index: 5, kind: input, shape index: {}]
  %s6 = inlined_call_operand.vmem [shape: f32[1,32], index: 6, kind: input, shape index: {}]
  %s7 = inlined_call_operand.vmem [shape: f32[32,128], index: 7, kind: input, shape index: {}]
  %s8 = inlined_call_operand.vmem [shape: f32[1,128], index: 8, kind: input, shape index: {}]
  %s9 = inlined_call_operand.hbm [shape: f32[8,10], index: 9, kind: output, shape index: {0}]
  %s10 = inlined_call_operand.vmem [shape: f32[8,1], index: 10, kind: output, shape index: {1}]
  %11 = xla_tuple %s9, %s10
  %s12 = sld [smem:[#allocation0]]
  $region54: #{cida_forward.1} parent=0
    _
  %s14 = ssub.s32 1, %s12
  %s15 = scalar_select 0, %s14, %s12
  $region1: #{cida_forward.1} parent=0
    #allocation2 [shape = 'u8[4096]{0}', space=vmem, size = 0x1000, scoped, tag = 'output window, operand 0, single buffered']
    #allocation3 [shape = 's32[1]{0}', space=sflag, size = 0x4, scoped, tag = 'scoped memory for cida_forward.1']
    %16 = vsyncpa [#allocation3], 0
    // Predicated region
    $region2: #{cida_forward.1} parent=1 // pred_check
      _
    $region3: #{cida_forward.1} parent=1 // pred_check_branch
      %18 = sbr.rel (0) target = $region5
    $region4: #{cida_forward.1} parent=1 // pred_region
      _
    $region5: #{cida_forward.1} parent=1 // pred_fallthru
      _
    // Predicated region
    $region6: #{cida_forward.1} parent=1 // pred_check
      _
    $region7: #{cida_forward.1} parent=1 // pred_check_branch
      %20 = sbr.rel (0) target = $region9
    $region8: #{cida_forward.1} parent=1 // pred_region
      _
    $region9: #{cida_forward.1} parent=1 // pred_fallthru
      _
    // Predicated region
    $region10: #{cida_forward.1} parent=1 // pred_check
      _
    $region11: #{cida_forward.1} parent=1 // pred_check_branch
      %22 = sbr.rel (0) target = $region13
    $region12: #{cida_forward.1} parent=1 // pred_region
      _
    $region13: #{cida_forward.1} parent=1 // pred_fallthru
      _
    // Predicated region
    $region14: #{cida_forward.1} parent=1 // pred_check
      _
    $region15: #{cida_forward.1} parent=1 // pred_check_branch
      %24 = sbr.rel (0) target = $region17
    $region16: #{cida_forward.1} parent=1 // pred_region
      _
    $region17: #{cida_forward.1} parent=1 // pred_fallthru
      _
    // Predicated region
    $region18: #{cida_forward.1} parent=1 // pred_check
      _
    $region19: #{cida_forward.1} parent=1 // pred_check_branch
      %26 = sbr.rel (0) target = $region21
    $region20: #{cida_forward.1} parent=1 // pred_region
      _
    $region21: #{cida_forward.1} parent=1 // pred_fallthru
      _
    // Predicated region
    $region22: #{cida_forward.1} parent=1 // pred_check
      _
    $region23: #{cida_forward.1} parent=1 // pred_check_branch
      %28 = sbr.rel (0) target = $region25
    $region24: #{cida_forward.1} parent=1 // pred_region
      _
    $region25: #{cida_forward.1} parent=1 // pred_fallthru
      _
    // Predicated region
    $region26: #{cida_forward.1} parent=1 // pred_check
      _
    $region27: #{cida_forward.1} parent=1 // pred_check_branch
      %30 = sbr.rel (0) target = $region29
    $region28: #{cida_forward.1} parent=1 // pred_region
      _
    $region29: #{cida_forward.1} parent=1 // pred_fallthru
      _
    // Predicated region
    $region30: #{cida_forward.1} parent=1 // pred_check
      _
    $region31: #{cida_forward.1} parent=1 // pred_check_branch
      %32 = sbr.rel (0) target = $region33
    $region32: #{cida_forward.1} parent=1 // pred_region
      _
    $region33: #{cida_forward.1} parent=1 // pred_fallthru
      _
    // Predicated region
    $region34: #{cida_forward.1} parent=1 // pred_check
      _
    $region35: #{cida_forward.1} parent=1 // pred_check_branch
      %34 = sbr.rel (0) target = $region37
    $region36: #{cida_forward.1} parent=1 // pred_region
      _
    $region37: #{cida_forward.1} parent=1 // pred_fallthru
      _
    %v35 = vld [vmem:[%s0] sm:$0xff]
    %v36 = vld [vmem:[%s1] sm:$0xff]
    %v37 = vld [vmem:[%s1 + $0x8] sm:$0xff]
    %v38 = vld [vmem:[%s1 + $0x10] sm:$0xff]
    %v39 = vld [vmem:[%s1 + $0x18] sm:$0xff]
    %v40 = vld [vmem:[%s1 + $0x20] sm:$0x1]
    %v41 = vld [vmem:[%s2] sm:$0x1]
    %v43 = vperm.slane %v41, 0
    %vm45 = vcmask 269312
    %v47 = vsel %vm45, %v35, 0
    %vm49 = vcmask 1040384
    %v51 = vsel %vm49, %v40, 0
    %53 = vmatpush.msra.mxu0 0.0
    %54 = vmatpush.msra.mxu0 0.0
    %55 = vmatpush.msra.mxu0 0.0
    %56 = vmatpush.msra.mxu0 0.0
    %57 = vmatpush.msra.mxu0 0.0
    %58 = vmatpush.msra.mxu0 0.0
    %59 = vmatpush.msra.mxu0 0.0
    %60 = vmatpush.msra.mxu0 0.0
    %61 = vmatpush.msra.mxu0 0.0
    %62 = vmatpush.msra.mxu0 0.0
    %63 = vmatpush.msra.mxu0 0.0
    %64 = vmatpush.msra.mxu0 %v51
    %65 = vmatpush.msra.mxu0 %v39
    %66 = vmatpush.msra.mxu0 %v38
    %67 = vmatpush.msra.mxu0 %v37
    %68 = vmatpush.msra.mxu0 %v36
    %69 = vmatmul.f32.gmra.mxu0 %v47
    %v70 = vpop.f32.mrf.mxu0
    %v71 = vadd.f32 %v43, %v70
    %72 = vdwg.mxu0
    %v73 = vmax.f32 %v71, 0.0
    %v74 = vld [vmem:[%s3] sm:$0xff]
    %v75 = vld [vmem:[%s3 + $0x8] sm:$0xff]
    %v76 = vld [vmem:[%s3 + $0x10] sm:$0xff]
    %v77 = vld [vmem:[%s3 + $0x18] sm:$0xff]
    %v78 = vld [vmem:[%s3 + $0x20] sm:$0xff]
    %v79 = vld [vmem:[%s3 + $0x28] sm:$0xff]
    %v80 = vld [vmem:[%s3 + $0x30] sm:$0xff]
    %v81 = vld [vmem:[%s3 + $0x38] sm:$0xff]
    %v82 = vld [vmem:[%s3 + $0x40] sm:$0xff]
    %v83 = vld [vmem:[%s3 + $0x48] sm:$0xff]
    %v84 = vld [vmem:[%s4] sm:$0x1]
    %v86 = vperm.slane %v84, 0
    %vm88 = vcmask 654336
    %v90 = vsel %vm88, %v73, 0
    %92 = vmatpush.msra.mxu0 0.0
    %93 = vmatpush.msra.mxu0 0.0
    %94 = vmatpush.msra.mxu0 0.0
    %95 = vmatpush.msra.mxu0 0.0
    %96 = vmatpush.msra.mxu0 0.0
    %97 = vmatpush.msra.mxu0 0.0
    %98 = vmatpush.msra.mxu0 %v83
    %99 = vmatpush.msra.mxu0 %v82
    %100 = vmatpush.msra.mxu0 %v81
    %101 = vmatpush.msra.mxu0 %v80
    %102 = vmatpush.msra.mxu0 %v79
    %103 = vmatpush.msra.mxu0 %v78
    %104 = vmatpush.msra.mxu0 %v77
    %105 = vmatpush.msra.mxu0 %v76
    %106 = vmatpush.msra.mxu0 %v75
    %107 = vmatpush.msra.mxu0 %v74
    %108 = vmatmul.f32.gmra.mxu0 %v90
    %v109 = vpop.f32.mrf.mxu0
    %v110 = vadd.f32 %v86, %v109
    %111 = vdwg.mxu0
    %v112 = vmax.f32 %v110, 0.0
    %v113 = vld [vmem:[%s5] sm:$0xff]
    %v114 = vld [vmem:[%s5 + $0x8] sm:$0xff]
    %v115 = vld [vmem:[%s5 + $0x10] sm:$0xff]
    %v116 = vld [vmem:[%s6] sm:$0x1]
    %v118 = vperm.slane %v116, 0
    %vm120 = vcmask 195584
    %v122 = vsel %vm120, %v112, 0
    %124 = vmatpush.msra.mxu0 0.0
    %125 = vmatpush.msra.mxu0 0.0
    %126 = vmatpush.msra.mxu0 0.0
    %127 = vmatpush.msra.mxu0 0.0
    %128 = vmatpush.msra.mxu0 0.0
    %129 = vmatpush.msra.mxu0 0.0
    %130 = vmatpush.msra.mxu0 0.0
    %131 = vmatpush.msra.mxu0 0.0
    %132 = vmatpush.msra.mxu0 0.0
    %133 = vmatpush.msra.mxu0 0.0
    %134 = vmatpush.msra.mxu0 0.0
    %135 = vmatpush.msra.mxu0 0.0
    %136 = vmatpush.msra.mxu0 0.0
    %137 = vmatpush.msra.mxu0 %v115
    %138 = vmatpush.msra.mxu0 %v114
    %139 = vmatpush.msra.mxu0 %v113
    %140 = vmatmul.f32.gmra.mxu0 %v122
    %v141 = vpop.f32.mrf.mxu0
    %v142 = vadd.f32 %v118, %v141
    %143 = vdwg.mxu0
    %v144 = vmax.f32 %v142, 0.0
    %v145 = vld [vmem:[%s7] sm:$0xff]
    %v146 = vld [vmem:[%s7 + $0x8] sm:$0xff]
    %v147 = vld [vmem:[%s7 + $0x10] sm:$0xff]
    %v148 = vld [vmem:[%s7 + $0x18] sm:$0xff]
    %v149 = vld [vmem:[%s8] sm:$0x1]
    %v151 = vperm.slane %v149, 0
    %vm153 = vcmask 261120
    %v155 = vsel %vm153, %v144, 0
    %157 = vmatpush.msra.mxu0 0.0
    %158 = vmatpush.msra.mxu0 0.0
    %159 = vmatpush.msra.mxu0 0.0
    %160 = vmatpush.msra.mxu0 0.0
    %161 = vmatpush.msra.mxu0 0.0
    %162 = vmatpush.msra.mxu0 0.0
    %163 = vmatpush.msra.mxu0 0.0
    %164 = vmatpush.msra.mxu0 0.0
    %165 = vmatpush.msra.mxu0 0.0
    %166 = vmatpush.msra.mxu0 0.0
    %167 = vmatpush.msra.mxu0 0.0
    %168 = vmatpush.msra.mxu0 0.0
    %169 = vmatpush.msra.mxu0 %v148
    %170 = vmatpush.msra.mxu0 %v147
    %171 = vmatpush.msra.mxu0 %v146
    %172 = vmatpush.msra.mxu0 %v145
    %173 = vmatmul.f32.gmra.mxu0 %v155
    %v174 = vpop.f32.mrf.mxu0
    %v175 = vadd.f32 %v151, %v174
    %176 = vdwg.mxu0
    %v177 = vlaneseq
    %v178 = vand.u32 %v177, 127
    %vm179 = vcmp.lt.s32.totalorder %v178, 10
    %v180 = vsel %vm179, %v175, -inf
    %181 = vmax.xlane.f32.xlu0 %v180
    %v182 = vpop.xlane.xlu0 %181
    %v183 = vsub.f32 %v180, %v182
    %v184 = vmul.f32 %v183, 1.442695
    %v185 = vpow.pop %v184
    %186 = vadd.xlane.f32.xlu0 %v185
    %v187 = vpop.xlane.xlu0 %186
    %v188 = vlog2.pop %v187
    %v189 = vmul.f32 %v188, 0.6931472
    %v190 = vadd.f32 %v182, %v189
    %v191 = vsub.f32 %v175, %v190
    %vm192 = vcmask 80896
    %193 = vst.msk [vmem:[#allocation2] sm:$0xff] %vm192, %v191
    %195 = vrot.lane.b32.xlu0 %v175, 118
    %v196 = vpop.permute.xlu0 %195
    %vm198 = vcmask 7168
    %199 = vst.msk [vmem:[%s10] sm:$0xff] %vm198, %v196
    // Predicated region
    $region38: #{cida_forward.1} parent=1 // pred_check
      _
    $region39: #{cida_forward.1} parent=1 // pred_check_branch
      %201 = sbr.rel (0) target = $region41
    $region40: #{cida_forward.1} parent=1 // pred_region
      %203 = vsyncadd [#allocation3], 0
      %s205 = sshll.u32 [#allocation2], 4
      %s206 = int_to_ptr.vmem [resolvable:$true] %s205
      %s207 = sshll.u32 %s9, 4
      %s208 = int_to_ptr.hbm [resolvable:$true] %s207
      %210 = dma.vmem_to_hbm [thread:$0]  %s206, 128, %s208, [#allocation3]
    $region41: #{cida_forward.1} parent=1 // pred_fallthru
      _
    // Predicated region
    $region42: #{cida_forward.1} parent=1 // pred_check
      _
    $region43: #{cida_forward.1} parent=1 // pred_check_branch
      %212 = sbr.rel (0) target = $region45
    $region44: #{cida_forward.1} parent=1 // pred_region
      _
    $region45: #{cida_forward.1} parent=1 // pred_fallthru
      _
    // Predicated region
    $region46: #{cida_forward.1} parent=1 // pred_check
      _
    $region47: #{cida_forward.1} parent=1 // pred_check_branch
      %214 = sbr.rel (0) target = $region49
    $region48: #{cida_forward.1} parent=1 // pred_region
      %216 = dma.done [#allocation3], 128
    $region49: #{cida_forward.1} parent=1 // pred_fallthru
      _
    // Predicated region
    $region50: #{cida_forward.1} parent=1 // pred_check
      _
    $region51: #{cida_forward.1} parent=1 // pred_check_branch
      %218 = sbr.rel (0) target = $region53
    $region52: #{cida_forward.1} parent=1 // pred_region
      _
    $region53: #{cida_forward.1} parent=1 // pred_fallthru
      _
    %219 = vsyncpa [#allocation3], 1

</llo_original>
